<compile_context>
chip_gen: v5e
topology: v5e:2x2
jax: 0.10.0
libtpu: 0.0.40
codegen_flags: <defaults>
</compile_context>

<pallas_src>
import math

import jax
import jax.numpy as jnp
from jax.experimental import pallas as pl
from jax.experimental.pallas import tpu as pltpu


def _pos_enc_kernel(x_ref, pe_ref, o_ref):
    # x_ref / o_ref: (bb, tile_s, D); pe_ref: (tile_s, D) broadcast over the batch block.
    o_ref[...] = x_ref[...] + pe_ref[...]


def make_positional_encoding(max_len, emb_dim, dtype=jnp.float32):
    """Build the fixed sin/cos table exactly like the PyTorch module's __init__."""
    assert emb_dim % 2 == 0, "PositionalEncoding requires an even emb_dim"
    position = jnp.arange(max_len, dtype=jnp.float32)[:, None]                     # (L, 1)
    div_term = jnp.exp(
        jnp.arange(0, emb_dim, 2, dtype=jnp.float32) * (-math.log(10000.0) / emb_dim)
    )                                                                              # (D/2,)
    angles = position * div_term                                                   # (L, D/2)
    # even columns <- sin, odd columns <- cos (interleave)
    pe = jnp.stack([jnp.sin(angles), jnp.cos(angles)], axis=-1).reshape(max_len, emb_dim)
    return pe.astype(dtype)


def _vmem_capacity_bytes():
    """Physical VMEM per core; conservative (v7x-sized) fallback if unavailable."""
    try:
        return int(pltpu.get_tpu_info().vmem_capacity_bytes)
    except Exception:
        return 64 << 20


def _choose_tiling(B, S, D, dsize, block_budget_bytes):
    """Pick (batch_block, seq_tile, num_b, num_s, granularity)."""
    g = {4: 8, 2: 16, 1: 32}.get(dsize, 32)      # dtype-aware sublane granularity
    row_bytes = D * dsize

    # Whole batch per block unless even a minimum seq tile would blow the budget.
    bb = B
    if B * g * row_bytes > block_budget_bytes:
        bb = min(B, max(1, block_budget_bytes // (g * row_bytes)))

    if S <= g:
        tile_s = S                               # full-extent seq block (always legal)
    else:
        s_aligned = (S // g) * g                 # largest aligned tile not exceeding S
        cap = max(g, ((block_budget_bytes // (bb * row_bytes)) // g) * g)
        tile_s = min(s_aligned, cap)

    num_s = pl.cdiv(S, tile_s)
    num_b = pl.cdiv(B, bb)

    # v7x: if everything fits in a single step but the tensor is large, split the seq
    # axis in two so both TensorCores get work on the "parallel" grid.
    if num_s == 1 and num_b == 1 and tile_s >= 2 * g and B * S * row_bytes >= (1 << 20):
        tile_s = ((pl.cdiv(S, 2) + g - 1) // g) * g
        num_s = pl.cdiv(S, tile_s)

    return bb, tile_s, num_b, num_s, g


@jax.jit
def positional_encoding_forward(x, pe):
    B, S, D = x.shape
    assert pe.shape[0] >= S and pe.shape[1] == D

    pe = pe.astype(x.dtype)                      # single cast; no in-kernel up/down-cast
    dsize = jnp.dtype(x.dtype).itemsize

    block_budget = 4 << 20                       # ~4 MiB x-block amortizes ~0.35us/step
    bb, tile_s, num_b, num_s, g = _choose_tiling(B, S, D, dsize, block_budget)

    # Only when S < sublane granularity must the pe block equal pe's full leading dim.
    pe_in = pe[:S] if (tile_s % g != 0) else pe

    # VMEM: double-buffered x-in / out / pe blocks + headroom, capped below physical VMEM.
    x_block_bytes = bb * tile_s * D * dsize
    pe_block_bytes = tile_s * D * dsize
    vmem_cap = _vmem_capacity_bytes()
    vmem_limit = 4 * x_block_bytes + 2 * pe_block_bytes + (4 << 20)
    vmem_limit = int(max(16 << 20, min(vmem_limit, (3 * vmem_cap) // 4)))

    # Seq-tile axis outer, batch-block axis inner: the pe block index depends only on the
    # outer axis, so its resident tile is reused across all batch blocks (no re-DMA).
    grid = (num_s, num_b)

    return pl.pallas_call(
        _pos_enc_kernel,
        out_shape=jax.ShapeDtypeStruct((B, S, D), x.dtype),
        grid_spec=pltpu.PrefetchScalarGridSpec(
            num_scalar_prefetch=0,
            grid=grid,
            in_specs=[
                pl.BlockSpec((bb, tile_s, D), lambda s, b: (b, s, 0)),   # x
                pl.BlockSpec((tile_s, D), lambda s, b: (s, 0)),          # pe (batch-invariant)
            ],
            out_specs=pl.BlockSpec((bb, tile_s, D), lambda s, b: (b, s, 0)),
        ),
        compiler_params=pltpu.CompilerParams(
            dimension_semantics=("parallel", "parallel"),
            vmem_limit_bytes=vmem_limit,
        ),
    )(x, pe_in)


def reference_forward(x, pe):
    """Pure-JAX reference of PositionalEncoding.forward."""
    S = x.shape[1]
    return x + pe[None, :S, :].astype(x.dtype)


if __name__ == "__main__":
    # Small shapes consistent with the module: batch=2, seq=16, emb_dim=128 (lane-dense).
    B, S, D = 2, 16, 128
    MAX_LEN = 64

    key = jax.random.PRNGKey(0)
    x = jax.random.normal(key, (B, S, D), jnp.float32)
    pe = make_positional_encoding(MAX_LEN, D)

    out = positional_encoding_forward(x, pe)
    out = jax.block_until_ready(out)

    ref = reference_forward(x, pe)
    assert out.shape == (B, S, D)
    assert jnp.allclose(out, ref, atol=1e-6, rtol=1e-6), "mismatch vs JAX reference"

    print("KERNEL_OK")
</pallas_src>

<mosaic_0001>
module attributes {stable_mosaic.version = 11 : i64} {
  func.func @_pos_enc_kernel(%arg0: i32, %arg1: i32, %arg2: memref<2x16x128xf32, #tpu.memory_space<vmem>>, %arg3: memref<16x128xf32, #tpu.memory_space<vmem>>, %arg4: memref<2x16x128xf32, #tpu.memory_space<vmem>>) attributes {dimension_semantics = [#tpu.dimension_semantics<parallel>, #tpu.dimension_semantics<parallel>], iteration_bounds = array<i64: 1, 1>, scalar_prefetch = 0 : i64, scratch_operands = 0 : i64, tpu.core_type = #tpu.core_type<tc>, window_params = [{transform_indices = @transform_0, window_bounds = array<i64: 2, 16, 128>}, {transform_indices = @transform_1, window_bounds = array<i64: 16, 128>}, {transform_indices = @transform_2, window_bounds = array<i64: 2, 16, 128>}]} {
    %c0 = arith.constant 0 : index
    %c0_0 = arith.constant 0 : index
    %c0_1 = arith.constant 0 : index
    %0 = vector.load %arg2[%c0, %c0_0, %c0_1] : memref<2x16x128xf32, #tpu.memory_space<vmem>>, vector<2x16x128xf32>
    %c0_2 = arith.constant 0 : index
    %c0_3 = arith.constant 0 : index
    %1 = vector.load %arg3[%c0_2, %c0_3] : memref<16x128xf32, #tpu.memory_space<vmem>>, vector<16x128xf32>
    %2 = vector.shape_cast %1 : vector<16x128xf32> to vector<1x16x128xf32>
    %3 = vector.broadcast %2 : vector<1x16x128xf32> to vector<2x16x128xf32>
    %4 = arith.addf %0, %3 : vector<2x16x128xf32>
    %c0_4 = arith.constant 0 : index
    %c0_5 = arith.constant 0 : index
    %c0_6 = arith.constant 0 : index
    %5 = vector.load %arg4[%c0_4, %c0_5, %c0_6] : memref<2x16x128xf32, #tpu.memory_space<vmem>>, vector<2x16x128xf32>
    tpu.vector_store %arg4[%c0_4, %c0_5, %c0_6], %4 {strides = array<i32>} : memref<2x16x128xf32, #tpu.memory_space<vmem>>, vector<2x16x128xf32>,
    return
  }
  func.func @transform_0(%arg0: i32, %arg1: i32) -> (i32, i32, i32) {
    %c0_i32 = arith.constant 0 : i32
    %c0_i32_0 = arith.constant 0 : i32
    return %arg1, %arg0, %c0_i32 : i32, i32, i32
  }
  func.func @transform_1(%arg0: i32, %arg1: i32) -> (i32, i32) {
    %c0_i32 = arith.constant 0 : i32
    %c0_i32_0 = arith.constant 0 : i32
    return %arg0, %c0_i32 : i32, i32
  }
  func.func @transform_2(%arg0: i32, %arg1: i32) -> (i32, i32, i32) {
    %c0_i32 = arith.constant 0 : i32
    %c0_i32_0 = arith.constant 0 : i32
    return %arg1, %arg0, %c0_i32 : i32, i32, i32
  }
}

</mosaic_0001>

<llo_original>
// kernel: positional_encoding_forward.1
$region0: #{positional_encoding_forward.1}
  #allocation0 [shape = 'u32[]', space=smem, size = 0x4, offset = 0x4, fixed_abs, tag = 'smem constant byte address 0x4 - core index']
  #allocation1 [shape = 'u32[72,128]{1,0:T(1,128)}', space=vmem, size = 0x9000, scoped, tag = 'internal scratch']
  %s0 = inlined_call_operand.hbm [shape: f32[2,16,128], index: 0, kind: input, shape index: {}]
  %s1 = inlined_call_operand.hbm [shape: f32[64,128], index: 1, kind: input, shape index: {}]
  %s2 = inlined_call_operand.hbm [shape: f32[2,16,128], index: 2, kind: output, shape index: {}]
  %s3 = sld [smem:[#allocation0]]
  $region26: #{positional_encoding_forward.1} parent=0
    _
  %s5 = ssub.s32 1, %s3
  %s6 = scalar_select 0, %s5, %s3
  $region1: #{positional_encoding_forward.1} parent=0
    #allocation2 [shape = 'u8[16384]{0}', space=vmem, size = 0x4000, scoped, tag = 'input window, operand 0, single buffered']
    #allocation3 [shape = 's32[1]{0}', space=sflag, size = 0x4, scoped, tag = 'scoped memory for positional_encoding_forward.1']
    #allocation4 [shape = 's32[1]{0}', space=sflag, size = 0x4, scoped, tag = 'scoped memory for positional_encoding_forward.1']
    #allocation5 [shape = 'u8[8192]{0}', space=vmem, size = 0x2000, scoped, tag = 'input window, operand 1, single buffered']
    #allocation6 [shape = 's32[1]{0}', space=sflag, size = 0x4, scoped, tag = 'scoped memory for positional_encoding_forward.1']
    #allocation7 [shape = 'u8[16384]{0}', space=vmem, size = 0x4000, scoped, tag = 'output window, operand 0, single buffered']
    %7 = vsyncpa [#allocation3], 0
    %8 = vsyncpa [#allocation6], 0
    %9 = vsyncpa [#allocation4], 0
    // Predicated region
    $region2: #{positional_encoding_forward.1} parent=1 // pred_check
      _
    $region3: #{positional_encoding_forward.1} parent=1 // pred_check_branch
      %11 = sbr.rel (0) target = $region5
    $region4: #{positional_encoding_forward.1} parent=1 // pred_region
      %13 = vsyncadd [#allocation3], 0
      %s14 = sshll.u32 %s0, 4
      %s15 = int_to_ptr.hbm [resolvable:$true] %s14
      %s16 = sshll.u32 [#allocation2], 4
      %s17 = int_to_ptr.vmem [resolvable:$true] %s16
      %22 = dma.hbm_to_vmem [thread:$0]  %s15, 512, %s17, [#allocation3], 128, 128, 8
    $region5: #{positional_encoding_forward.1} parent=1 // pred_fallthru
      _
    // Predicated region
    $region6: #{positional_encoding_forward.1} parent=1 // pred_check
      _
    $region7: #{positional_encoding_forward.1} parent=1 // pred_check_branch
      %24 = sbr.rel (0) target = $region9
    $region8: #{positional_encoding_forward.1} parent=1 // pred_region
      %26 = vsyncadd [#allocation6], 0
      %s27 = sshll.u32 %s1, 4
      %s28 = int_to_ptr.hbm [resolvable:$true] %s27
      %s29 = sshll.u32 [#allocation5], 4
      %s30 = int_to_ptr.vmem [resolvable:$true] %s29
      %35 = dma.hbm_to_vmem [thread:$0]  %s28, 256, %s30, [#allocation6], 128, 128, 8
    $region9: #{positional_encoding_forward.1} parent=1 // pred_fallthru
      _
    // Predicated region
    $region10: #{positional_encoding_forward.1} parent=1 // pred_check
      _
    $region11: #{positional_encoding_forward.1} parent=1 // pred_check_branch
      %37 = sbr.rel (0) target = $region13
    $region12: #{positional_encoding_forward.1} parent=1 // pred_region
      %39 = dma.done [#allocation3], 512
    $region13: #{positional_encoding_forward.1} parent=1 // pred_fallthru
      _
    // Predicated region
    $region14: #{positional_encoding_forward.1} parent=1 // pred_check
      _
    $region15: #{positional_encoding_forward.1} parent=1 // pred_check_branch
      %41 = sbr.rel (0) target = $region17
    $region16: #{positional_encoding_forward.1} parent=1 // pred_region
      %43 = dma.done [#allocation6], 256
    $region17: #{positional_encoding_forward.1} parent=1 // pred_fallthru
      _
    %v44 = vld [vmem:[#allocation2] sm:$0xff]
    %v45 = vld [vmem:[#allocation2 + $0x8] sm:$0xff]
    %v46 = vld [vmem:[#allocation2 + $0x10] sm:$0xff]
    %v47 = vld [vmem:[#allocation2 + $0x18] sm:$0xff]
    %v48 = vld [vmem:[#allocation5] sm:$0xff]
    %v49 = vld [vmem:[#allocation5 + $0x8] sm:$0xff]
    %v50 = vadd.f32 %v44, %v48
    %v51 = vadd.f32 %v45, %v49
    %v52 = vadd.f32 %v46, %v48
    %v53 = vadd.f32 %v47, %v49
    %54 = vst [vmem:[#allocation7] sm:$0xff] %v50
    %55 = vst [vmem:[#allocation7 + $0x8] sm:$0xff] %v51
    %56 = vst [vmem:[#allocation7 + $0x10] sm:$0xff] %v52
    %57 = vst [vmem:[#allocation7 + $0x18] sm:$0xff] %v53
    // Predicated region
    $region18: #{positional_encoding_forward.1} parent=1 // pred_check
      _
    $region19: #{positional_encoding_forward.1} parent=1 // pred_check_branch
      %59 = sbr.rel (0) target = $region21
    $region20: #{positional_encoding_forward.1} parent=1 // pred_region
      %61 = vsyncadd [#allocation4], 0
      %s62 = sshll.u32 [#allocation7], 4
      %s63 = int_to_ptr.vmem [resolvable:$true] %s62
      %s64 = sshll.u32 %s2, 4
      %s65 = int_to_ptr.hbm [resolvable:$true] %s64
      %70 = dma.vmem_to_hbm [thread:$0]  %s63, 512, %s65, [#allocation4], 128, 128, 8
    $region21: #{positional_encoding_forward.1} parent=1 // pred_fallthru
      _
    // Predicated region
    $region22: #{positional_encoding_forward.1} parent=1 // pred_check
      _
    $region23: #{positional_encoding_forward.1} parent=1 // pred_check_branch
      %72 = sbr.rel (0) target = $region25
    $region24: #{positional_encoding_forward.1} parent=1 // pred_region
      %74 = dma.done [#allocation4], 512
    $region25: #{positional_encoding_forward.1} parent=1 // pred_fallthru
      _
    %75 = vsyncpa [#allocation3], 1
    %76 = vsyncpa [#allocation6], 1
    %77 = vsyncpa [#allocation4], 1

</llo_original>
